<compile_context>
chip_gen: v5e
topology: v5e:2x2
jax: 0.10.0
libtpu: 0.0.40
codegen_flags: <defaults>
</compile_context>

<pallas_src>
import jax
import jax.numpy as jnp
from jax.experimental import pallas as pl
from jax.experimental.pallas import tpu as pltpu


def _round_up(x: int, m: int) -> int:
    return (x + m - 1) // m * m


def _mlp_deep_kernel(x_ref, w1_ref, w2_ref, w3_ref, w4_ref, b_ref, o_ref):
    """One batch tile of the fused 4-layer MLP.

    x_ref : (TILE_M, IN_COLS) f32/bf16 batch tile of flattened pixels
    w*_ref: bf16 weights (zero-padded, lane-aligned), grid-resident
    b_ref : (4, BIAS_PAD)     f32   packed biases [b1; b2; b3; b4]
    o_ref : (TILE_M, C_PAD)   f32   lane-dense padded logits
    """
    h_pad = w1_ref.shape[1]
    c_pad = w4_ref.shape[1]

    # Cast x to bf16 in-kernel (no wrapper pad/cast pre-pass, no extra HBM
    # traffic); a no-op if the caller already supplies bf16.
    x = x_ref[...].astype(jnp.bfloat16)
    biases = b_ref[...]                       # f32

    # Layer 1: bf16 MXU matmul, f32 accumulate; bias + ReLU in f32 on the VPU.
    h = jnp.dot(x, w1_ref[...], preferred_element_type=jnp.float32)
    h = jnp.maximum(h + biases[0:1, :h_pad], 0.0)

    # Layer 2
    h = jnp.dot(h.astype(jnp.bfloat16), w2_ref[...],
                preferred_element_type=jnp.float32)
    h = jnp.maximum(h + biases[1:2, :h_pad], 0.0)

    # Layer 3
    h = jnp.dot(h.astype(jnp.bfloat16), w3_ref[...],
                preferred_element_type=jnp.float32)
    h = jnp.maximum(h + biases[2:3, :h_pad], 0.0)

    # Layer 4 (head): no activation.
    logits = jnp.dot(h.astype(jnp.bfloat16), w4_ref[...],
                     preferred_element_type=jnp.float32)
    o_ref[...] = (logits + biases[3:4, :c_pad]).astype(o_ref.dtype)


def _choose_tile_m(b: int, tile_m_max: int) -> int:
    """Batch-tile heuristic.

    * Tiny batch (<=128): one full-array block -> no row padding, no partial
      blocks (the "block == full array dim" exemption covers the 8-row rule).
    * Otherwise: >= 2 grid steps so v7x's two TensorCores both get work under
      dimension_semantics=("parallel",); balanced tiles to limit dead rows;
      tile rounded to a multiple of 128 (bf16 sublane packing / MXU M
      granularity); capped at tile_m_max (sweep per chip generation).
    """
    if b <= 128:
        return b
    n_steps = max(2, pl.cdiv(b, tile_m_max))
    tile = _round_up(pl.cdiv(b, n_steps), 128)
    return max(128, min(tile, tile_m_max))


def mlp_classifier_deep(x_nchw, params, *, tile_m=512):
    """Forward pass equivalent to MLPClassifierDeep.forward (num_layers=4).

    Args:
      x_nchw: (b, 3, H, W) float32 (or bfloat16) image batch, NCHW as PyTorch.
      params: dict with w1..w4 of shape (in_dim, out_dim) and b1..b4 (out_dim,).
      tile_m: max batch-tile rows per grid step (sweep per chip generation).

    Returns:
      (b, num_classes) float32 logits.
    """
    b = x_nchw.shape[0]
    x_flat = x_nchw.reshape(b, -1)            # == torch x.view(b, -1); no copy
    in_dim = x_flat.shape[1]
    hidden = params["w1"].shape[1]
    num_classes = params["w4"].shape[1]

    # Lane-aligned (128-multiple) feature dims.
    h_pad = _round_up(hidden, 128)
    c_pad = _round_up(num_classes, 128)
    bias_pad = max(h_pad, c_pad)

    if in_dim % 128 == 0:                     # true for 3*H*W image inputs
        in_cols = in_dim
        x_in = x_flat
    else:                                     # rare fallback: lane-pad x once
        in_cols = _round_up(in_dim, 128)
        x_in = jnp.pad(x_flat, ((0, 0), (0, in_cols - in_dim)))

    tile_m = _choose_tile_m(b, tile_m)
    grid = (pl.cdiv(b, tile_m),)

    # bf16 MXU weights (halves weight DMA bytes); biases stay f32 and are
    # packed into a single (4, bias_pad) operand.
    def pad_w(w, rows, cols):
        w = w.astype(jnp.bfloat16)
        return jnp.pad(w, ((0, rows - w.shape[0]), (0, cols - w.shape[1])))

    w1 = pad_w(params["w1"], in_cols, h_pad)
    w2 = pad_w(params["w2"], h_pad, h_pad)
    w3 = pad_w(params["w3"], h_pad, h_pad)
    w4 = pad_w(params["w4"], h_pad, c_pad)

    def pad_b(v, cols):
        v = v.reshape(-1).astype(jnp.float32)
        return jnp.pad(v, (0, cols - v.shape[0]))

    biases = jnp.stack([pad_b(params["b1"], bias_pad),
                        pad_b(params["b2"], bias_pad),
                        pad_b(params["b3"], bias_pad),
                        pad_b(params["b4"], bias_pad)], axis=0)   # (4, bias_pad)

    # Explicit scoped-VMEM budget (v5e default is only 16 MiB): double-buffered
    # x/out tiles + resident weights + f32 activation scratch, with headroom,
    # capped at v7x's 64 MiB physical VMEM.
    x_bytes = 2 * tile_m * in_cols * x_in.dtype.itemsize
    out_bytes = 2 * tile_m * c_pad * 4
    w_bytes = 2 * 2 * (w1.size + w2.size + w3.size + w4.size)
    act_bytes = 4 * tile_m * max(h_pad, c_pad) * 4
    vmem_limit = int(min(64 << 20,
                         max(32 << 20,
                             2 * (x_bytes + out_bytes + w_bytes
                                  + 4 * biases.size + act_bytes))))

    flops = 2 * b * (in_cols * h_pad + 2 * h_pad * h_pad + h_pad * c_pad)
    bytes_accessed = int(b * in_cols * x_in.dtype.itemsize
                         + 2 * (w1.size + w2.size + w3.size + w4.size)
                         + 4 * biases.size + b * c_pad * 4)

    out = pl.pallas_call(
        _mlp_deep_kernel,
        out_shape=jax.ShapeDtypeStruct((b, c_pad), jnp.float32),
        grid=grid,
        in_specs=[
            # x: tiled over batch; double-buffered DMA hides behind compute.
            pl.BlockSpec((tile_m, in_cols), lambda i: (i, 0)),
            # Weights + packed biases: constant index_map -> grid-resident.
            # TODO(synk): at real-image scale (in_dim ~150K, hidden >= 512)
            # add a K-reduction grid axis for layer 1 (w1 tiled over rows,
            # f32 VMEM accumulator, K axis "arbitrary") and request
            # pipeline_mode=pl.Buffered(1) on these resident operands so the
            # working set fits v7x's 64 MiB VMEM.
            pl.BlockSpec((in_cols, h_pad), lambda i: (0, 0)),
            pl.BlockSpec((h_pad, h_pad), lambda i: (0, 0)),
            pl.BlockSpec((h_pad, h_pad), lambda i: (0, 0)),
            pl.BlockSpec((h_pad, c_pad), lambda i: (0, 0)),
            pl.BlockSpec((4, bias_pad), lambda i: (0, 0)),
        ],
        out_specs=pl.BlockSpec((tile_m, c_pad), lambda i: (i, 0)),
        compiler_params=pltpu.CompilerParams(
            dimension_semantics=("parallel",),
            vmem_limit_bytes=vmem_limit),
        cost_estimate=pl.CostEstimate(
            flops=flops, transcendentals=0, bytes_accessed=bytes_accessed),
    )(x_in, w1, w2, w3, w4, biases)

    # Slice padded lanes back to the true logits (rows are already exact).
    return out[:, :num_classes]


def init_params(key, input_dim, hidden_dim, num_classes, num_layers=4):
    """Deterministic synthetic parameters (PyTorch-like uniform fan-in init)."""
    dims = [input_dim] + [hidden_dim] * (num_layers - 1) + [num_classes]
    params = {}
    for i in range(num_layers):
        key, kw, kb = jax.random.split(key, 3)
        bound = 1.0 / jnp.sqrt(dims[i])
        params[f"w{i + 1}"] = jax.random.uniform(
            kw, (dims[i], dims[i + 1]), jnp.float32, -bound, bound)
        params[f"b{i + 1}"] = jax.random.uniform(
            kb, (dims[i + 1],), jnp.float32, -bound, bound)
    return params


if __name__ == "__main__":
    # Small shapes consistent with the module: (b, 3, H, W) image input.
    batch = 2
    h = w = 16
    hidden_dim = 32
    num_classes = 6
    num_layers = 4
    input_dim = 3 * h * w  # 768 (already a multiple of 128)

    key = jax.random.PRNGKey(0)
    key, kx = jax.random.split(key)
    x = jax.random.normal(kx, (batch, 3, h, w), jnp.float32)

    params = init_params(key, input_dim, hidden_dim, num_classes, num_layers)

    logits = mlp_classifier_deep(x, params)
    logits = jax.block_until_ready(logits)

    # Reference emulating the kernel's numerics (bf16 MXU operands, f32
    # accumulation / epilogue).  NOTE: inter-layer activations are bf16 by
    # design (intentional precision trade-off vs the f32 PyTorch module).
    def ref_forward(x_nchw, p):
        bf = lambda a: a.astype(jnp.bfloat16).astype(jnp.float32)
        hp = jax.lax.Precision.HIGHEST
        z = bf(x_nchw.reshape(x_nchw.shape[0], -1))
        for i in (1, 2, 3):
            z = jnp.dot(z, bf(p[f"w{i}"]), precision=hp) + p[f"b{i}"].reshape(1, -1)
            z = jnp.maximum(z, 0.0)
            z = bf(z)
        return jnp.dot(z, bf(p["w4"]), precision=hp) + p["b4"].reshape(1, -1)

    ref = ref_forward(x, params)
    assert logits.shape == (batch, num_classes)
    assert jnp.allclose(logits, ref, atol=5e-4, rtol=5e-4), (
        jnp.max(jnp.abs(logits - ref)))

    print("KERNEL_OK")
</pallas_src>

<mosaic_0001>
module attributes {stable_mosaic.version = 11 : i64} {
  func.func @_mlp_deep_kernel(%arg0: i32, %arg1: memref<2x768xf32, #tpu.memory_space<vmem>>, %arg2: memref<768x128xbf16, #tpu.memory_space<vmem>>, %arg3: memref<128x128xbf16, #tpu.memory_space<vmem>>, %arg4: memref<128x128xbf16, #tpu.memory_space<vmem>>, %arg5: memref<128x128xbf16, #tpu.memory_space<vmem>>, %arg6: memref<4x128xf32, #tpu.memory_space<vmem>>, %arg7: memref<2x128xf32, #tpu.memory_space<vmem>>) attributes {dimension_semantics = [#tpu.dimension_semantics<parallel>], iteration_bounds = array<i64: 1>, scalar_prefetch = 0 : i64, scratch_operands = 0 : i64, tpu.core_type = #tpu.core_type<tc>, window_params = [{transform_indices = @transform_0, window_bounds = array<i64: 2, 768>}, {pipeline_mode = #tpu.pipeline_mode<synchronous>, transform_indices = @transform_1, window_bounds = array<i64: 768, 128>}, {pipeline_mode = #tpu.pipeline_mode<synchronous>, transform_indices = @transform_2, window_bounds = array<i64: 128, 128>}, {pipeline_mode = #tpu.pipeline_mode<synchronous>, transform_indices = @transform_3, window_bounds = array<i64: 128, 128>}, {pipeline_mode = #tpu.pipeline_mode<synchronous>, transform_indices = @transform_4, window_bounds = array<i64: 128, 128>}, {pipeline_mode = #tpu.pipeline_mode<synchronous>, transform_indices = @transform_5, window_bounds = array<i64: 4, 128>}, {transform_indices = @transform_6, window_bounds = array<i64: 2, 128>}]} {
    %c0 = arith.constant 0 : index
    %c0_0 = arith.constant 0 : index
    %0 = vector.load %arg1[%c0, %c0_0] : memref<2x768xf32, #tpu.memory_space<vmem>>, vector<2x768xf32>
    %1 = arith.truncf %0 : vector<2x768xf32> to vector<2x768xbf16>
    %c0_1 = arith.constant 0 : index
    %c0_2 = arith.constant 0 : index
    %2 = vector.load %arg6[%c0_1, %c0_2] : memref<4x128xf32, #tpu.memory_space<vmem>>, vector<4x128xf32>
    %c0_3 = arith.constant 0 : index
    %c0_4 = arith.constant 0 : index
    %3 = vector.load %arg2[%c0_3, %c0_4] : memref<768x128xbf16, #tpu.memory_space<vmem>>, vector<768x128xbf16>
    %cst = arith.constant dense<0.000000e+00> : vector<2x128xf32>
    %4 = tpu.matmul %1, %3, %cst {dimension_numbers = #tpu.dot_dimension_numbers<[1], [0], [0], [1], [0, 0, 1, 1], [], []>} : vector<2x768xbf16>, vector<768x128xbf16>, vector<2x128xf32> -> vector<2x128xf32>
    %5 = vector.extract_strided_slice %2 {offsets = [0, 0], sizes = [1, 128], strides = [1, 1]} : vector<4x128xf32> to vector<1x128xf32>
    %6 = vector.broadcast %5 : vector<1x128xf32> to vector<2x128xf32>
    %7 = arith.addf %4, %6 : vector<2x128xf32>
    %cst_5 = arith.constant 0.000000e+00 : f32
    %8 = vector.broadcast %cst_5 : f32 to vector<2x128xf32>
    %9 = arith.maximumf %7, %8 : vector<2x128xf32>
    %10 = arith.truncf %9 : vector<2x128xf32> to vector<2x128xbf16>
    %c0_6 = arith.constant 0 : index
    %c0_7 = arith.constant 0 : index
    %11 = vector.load %arg3[%c0_6, %c0_7] : memref<128x128xbf16, #tpu.memory_space<vmem>>, vector<128x128xbf16>
    %cst_8 = arith.constant dense<0.000000e+00> : vector<2x128xf32>
    %12 = tpu.matmul %10, %11, %cst_8 {dimension_numbers = #tpu.dot_dimension_numbers<[1], [0], [0], [1], [0, 0, 1, 1], [], []>} : vector<2x128xbf16>, vector<128x128xbf16>, vector<2x128xf32> -> vector<2x128xf32>
    %13 = vector.extract_strided_slice %2 {offsets = [1, 0], sizes = [1, 128], strides = [1, 1]} : vector<4x128xf32> to vector<1x128xf32>
    %14 = vector.broadcast %13 : vector<1x128xf32> to vector<2x128xf32>
    %15 = arith.addf %12, %14 : vector<2x128xf32>
    %cst_9 = arith.constant 0.000000e+00 : f32
    %16 = vector.broadcast %cst_9 : f32 to vector<2x128xf32>
    %17 = arith.maximumf %15, %16 : vector<2x128xf32>
    %18 = arith.truncf %17 : vector<2x128xf32> to vector<2x128xbf16>
    %c0_10 = arith.constant 0 : index
    %c0_11 = arith.constant 0 : index
    %19 = vector.load %arg4[%c0_10, %c0_11] : memref<128x128xbf16, #tpu.memory_space<vmem>>, vector<128x128xbf16>
    %cst_12 = arith.constant dense<0.000000e+00> : vector<2x128xf32>
    %20 = tpu.matmul %18, %19, %cst_12 {dimension_numbers = #tpu.dot_dimension_numbers<[1], [0], [0], [1], [0, 0, 1, 1], [], []>} : vector<2x128xbf16>, vector<128x128xbf16>, vector<2x128xf32> -> vector<2x128xf32>
    %21 = vector.extract_strided_slice %2 {offsets = [2, 0], sizes = [1, 128], strides = [1, 1]} : vector<4x128xf32> to vector<1x128xf32>
    %22 = vector.broadcast %21 : vector<1x128xf32> to vector<2x128xf32>
    %23 = arith.addf %20, %22 : vector<2x128xf32>
    %cst_13 = arith.constant 0.000000e+00 : f32
    %24 = vector.broadcast %cst_13 : f32 to vector<2x128xf32>
    %25 = arith.maximumf %23, %24 : vector<2x128xf32>
    %26 = arith.truncf %25 : vector<2x128xf32> to vector<2x128xbf16>
    %c0_14 = arith.constant 0 : index
    %c0_15 = arith.constant 0 : index
    %27 = vector.load %arg5[%c0_14, %c0_15] : memref<128x128xbf16, #tpu.memory_space<vmem>>, vector<128x128xbf16>
    %cst_16 = arith.constant dense<0.000000e+00> : vector<2x128xf32>
    %28 = tpu.matmul %26, %27, %cst_16 {dimension_numbers = #tpu.dot_dimension_numbers<[1], [0], [0], [1], [0, 0, 1, 1], [], []>} : vector<2x128xbf16>, vector<128x128xbf16>, vector<2x128xf32> -> vector<2x128xf32>
    %29 = vector.extract_strided_slice %2 {offsets = [3, 0], sizes = [1, 128], strides = [1, 1]} : vector<4x128xf32> to vector<1x128xf32>
    %30 = vector.broadcast %29 : vector<1x128xf32> to vector<2x128xf32>
    %31 = arith.addf %28, %30 : vector<2x128xf32>
    %c0_17 = arith.constant 0 : index
    %c0_18 = arith.constant 0 : index
    %32 = vector.load %arg7[%c0_17, %c0_18] : memref<2x128xf32, #tpu.memory_space<vmem>>, vector<2x128xf32>
    tpu.vector_store %arg7[%c0_17, %c0_18], %31 {strides = array<i32>} : memref<2x128xf32, #tpu.memory_space<vmem>>, vector<2x128xf32>,
    return
  }
  func.func @transform_0(%arg0: i32) -> (i32, i32) {
    %c0_i32 = arith.constant 0 : i32
    %c0_i32_0 = arith.constant 0 : i32
    return %arg0, %c0_i32 : i32, i32
  }
  func.func @transform_1(%arg0: i32) -> (i32, i32) {
    %c0_i32 = arith.constant 0 : i32
    %c0_i32_0 = arith.constant 0 : i32
    %c0_i32_1 = arith.constant 0 : i32
    return %c0_i32, %c0_i32_0 : i32, i32
  }
  func.func @transform_2(%arg0: i32) -> (i32, i32) {
    %c0_i32 = arith.constant 0 : i32
    %c0_i32_0 = arith.constant 0 : i32
    %c0_i32_1 = arith.constant 0 : i32
    return %c0_i32, %c0_i32_0 : i32, i32
  }
  func.func @transform_3(%arg0: i32) -> (i32, i32) {
    %c0_i32 = arith.constant 0 : i32
    %c0_i32_0 = arith.constant 0 : i32
    %c0_i32_1 = arith.constant 0 : i32
    return %c0_i32, %c0_i32_0 : i32, i32
  }
  func.func @transform_4(%arg0: i32) -> (i32, i32) {
    %c0_i32 = arith.constant 0 : i32
    %c0_i32_0 = arith.constant 0 : i32
    %c0_i32_1 = arith.constant 0 : i32
    return %c0_i32, %c0_i32_0 : i32, i32
  }
  func.func @transform_5(%arg0: i32) -> (i32, i32) {
    %c0_i32 = arith.constant 0 : i32
    %c0_i32_0 = arith.constant 0 : i32
    %c0_i32_1 = arith.constant 0 : i32
    return %c0_i32, %c0_i32_0 : i32, i32
  }
  func.func @transform_6(%arg0: i32) -> (i32, i32) {
    %c0_i32 = arith.constant 0 : i32
    %c0_i32_0 = arith.constant 0 : i32
    return %arg0, %c0_i32 : i32, i32
  }
}

</mosaic_0001>

<llo_original>
// kernel: tpu_custom_call.1
$region0: #{tpu_custom_call.1}
  #allocation0 [shape = 'u32[]', space=smem, size = 0x4, offset = 0x4, fixed_abs, tag = 'smem constant byte address 0x4 - core index']
  #allocation1 [shape = 'u32[72,128]{1,0:T(1,128)}', space=vmem, size = 0x9000, scoped, tag = 'internal scratch']
  %s0 = inlined_call_operand.hbm [shape: f32[2,768], index: 0, kind: input, shape index: {}]
  %s1 = inlined_call_operand.hbm [shape: bf16[768,128], index: 1, kind: input, shape index: {}]
  %s2 = inlined_call_operand.hbm [shape: bf16[128,128], index: 2, kind: input, shape index: {}]
  %s3 = inlined_call_operand.hbm [shape: bf16[128,128], index: 3, kind: input, shape index: {}]
  %s4 = inlined_call_operand.hbm [shape: bf16[128,128], index: 4, kind: input, shape index: {}]
  %s5 = inlined_call_operand.vmem [shape: f32[4,128], index: 5, kind: input, shape index: {}]
  %s6 = inlined_call_operand.hbm [shape: f32[2,128], index: 6, kind: output, shape index: {}]
  %s7 = sld [smem:[#allocation0]]
  $region54: #{tpu_custom_call.1} parent=0
    _
  %s9 = ssub.s32 1, %s7
  %s10 = scalar_select 0, %s9, %s7
  $region1: #{tpu_custom_call.1} parent=0
    #allocation2 [shape = 'u8[6144]{0}', space=vmem, size = 0x1800, scoped, tag = 'input window, operand 0, single buffered']
    #allocation3 [shape = 's32[1]{0}', space=sflag, size = 0x4, scoped, tag = 'scoped memory for tpu_custom_call.1']
    #allocation4 [shape = 's32[1]{0}', space=sflag, size = 0x4, scoped, tag = 'scoped memory for tpu_custom_call.1']
    #allocation5 [shape = 'u8[196608]{0}', space=vmem, size = 0x30000, scoped, tag = 'input window, operand 1, single buffered']
    #allocation6 [shape = 's32[1]{0}', space=sflag, size = 0x4, scoped, tag = 'scoped memory for tpu_custom_call.1']
    #allocation7 [shape = 'u8[32768]{0}', space=vmem, size = 0x8000, scoped, tag = 'input window, operand 2, single buffered']
    #allocation8 [shape = 'u8[32768]{0}', space=vmem, size = 0x8000, scoped, tag = 'input window, operand 3, single buffered']
    #allocation9 [shape = 's32[1]{0}', space=sflag, size = 0x4, scoped, tag = 'scoped memory for tpu_custom_call.1']
    #allocation10 [shape = 'u8[32768]{0}', space=vmem, size = 0x8000, scoped, tag = 'input window, operand 4, single buffered']
    #allocation11 [shape = 'u8[1024]{0}', space=vmem, size = 0x400, scoped, tag = 'output window, operand 0, single buffered']
    %11 = vsyncpa [#allocation3], 0
    %12 = vsyncpa [#allocation6], 0
    %13 = vsyncpa [#allocation9], 0
    %14 = vsyncpa [#allocation4], 0
    // Predicated region
    $region2: #{tpu_custom_call.1} parent=1 // pred_check
      _
    $region3: #{tpu_custom_call.1} parent=1 // pred_check_branch
      %16 = sbr.rel (0) target = $region5
    $region4: #{tpu_custom_call.1} parent=1 // pred_region
      %18 = vsyncadd [#allocation3], 0
      %s20 = sshll.u32 %s0, 4
      %s21 = int_to_ptr.hbm [resolvable:$true] %s20
      %s22 = sshll.u32 [#allocation2], 4
      %s23 = int_to_ptr.vmem [resolvable:$true] %s22
      %25 = dma.hbm_to_vmem [thread:$0]  %s21, 192, %s23, [#allocation3]
    $region5: #{tpu_custom_call.1} parent=1 // pred_fallthru
      _
    // Predicated region
    $region6: #{tpu_custom_call.1} parent=1 // pred_check
      _
    $region7: #{tpu_custom_call.1} parent=1 // pred_check_branch
      %27 = sbr.rel (0) target = $region9
    $region8: #{tpu_custom_call.1} parent=1 // pred_region
      %29 = vsyncadd [#allocation6], 0
      %s30 = sshll.u32 %s1, 4
      %s31 = int_to_ptr.hbm [resolvable:$true] %s30
      %s32 = sshll.u32 [#allocation5], 4
      %s33 = int_to_ptr.vmem [resolvable:$true] %s32
      %38 = dma.hbm_to_vmem [thread:$0]  %s31, 6144, %s33, [#allocation6], 64, 64, 4
    $region9: #{tpu_custom_call.1} parent=1 // pred_fallthru
      _
    // Predicated region
    $region10: #{tpu_custom_call.1} parent=1 // pred_check
      _
    $region11: #{tpu_custom_call.1} parent=1 // pred_check_branch
      %40 = sbr.rel (0) target = $region13
    $region12: #{tpu_custom_call.1} parent=1 // pred_region
      %42 = vsyncadd [#allocation6], 0
      %s43 = sshll.u32 %s2, 4
      %s44 = int_to_ptr.hbm [resolvable:$true] %s43
      %s45 = sshll.u32 [#allocation7], 4
      %s46 = int_to_ptr.vmem [resolvable:$true] %s45
      %51 = dma.hbm_to_vmem [thread:$0]  %s44, 1024, %s46, [#allocation6], 64, 64, 4
    $region13: #{tpu_custom_call.1} parent=1 // pred_fallthru
      _
    // Predicated region
    $region14: #{tpu_custom_call.1} parent=1 // pred_check
      _
    $region15: #{tpu_custom_call.1} parent=1 // pred_check_branch
      %53 = sbr.rel (0) target = $region17
    $region16: #{tpu_custom_call.1} parent=1 // pred_region
      %55 = vsyncadd [#allocation9], 0
      %s56 = sshll.u32 %s3, 4
      %s57 = int_to_ptr.hbm [resolvable:$true] %s56
      %s58 = sshll.u32 [#allocation8], 4
      %s59 = int_to_ptr.vmem [resolvable:$true] %s58
      %64 = dma.hbm_to_vmem [thread:$0]  %s57, 1024, %s59, [#allocation9], 64, 64, 4
    $region17: #{tpu_custom_call.1} parent=1 // pred_fallthru
      _
    // Predicated region
    $region18: #{tpu_custom_call.1} parent=1 // pred_check
      _
    $region19: #{tpu_custom_call.1} parent=1 // pred_check_branch
      %66 = sbr.rel (0) target = $region21
    $region20: #{tpu_custom_call.1} parent=1 // pred_region
      %68 = vsyncadd [#allocation9], 0
      %s69 = sshll.u32 %s4, 4
      %s70 = int_to_ptr.hbm [resolvable:$true] %s69
      %s71 = sshll.u32 [#allocation10], 4
      %s72 = int_to_ptr.vmem [resolvable:$true] %s71
      %77 = dma.hbm_to_vmem [thread:$0]  %s70, 1024, %s72, [#allocation9], 64, 64, 4
    $region21: #{tpu_custom_call.1} parent=1 // pred_fallthru
      _
    // Predicated region
    $region22: #{tpu_custom_call.1} parent=1 // pred_check
      _
    $region23: #{tpu_custom_call.1} parent=1 // pred_check_branch
      %79 = sbr.rel (0) target = $region25
    $region24: #{tpu_custom_call.1} parent=1 // pred_region
      _
    $region25: #{tpu_custom_call.1} parent=1 // pred_fallthru
      _
    // Predicated region
    $region26: #{tpu_custom_call.1} parent=1 // pred_check
      _
    $region27: #{tpu_custom_call.1} parent=1 // pred_check_branch
      %81 = sbr.rel (0) target = $region29
    $region28: #{tpu_custom_call.1} parent=1 // pred_region
      %83 = dma.done [#allocation3], 192
    $region29: #{tpu_custom_call.1} parent=1 // pred_fallthru
      _
    // Predicated region
    $region30: #{tpu_custom_call.1} parent=1 // pred_check
      _
    $region31: #{tpu_custom_call.1} parent=1 // pred_check_branch
      %85 = sbr.rel (0) target = $region33
    $region32: #{tpu_custom_call.1} parent=1 // pred_region
      %87 = dma.done [#allocation6], 6144
    $region33: #{tpu_custom_call.1} parent=1 // pred_fallthru
      _
    // Predicated region
    $region34: #{tpu_custom_call.1} parent=1 // pred_check
      _
    $region35: #{tpu_custom_call.1} parent=1 // pred_check_branch
      %89 = sbr.rel (0) target = $region37
    $region36: #{tpu_custom_call.1} parent=1 // pred_region
      %91 = dma.done [#allocation6], 1024
    $region37: #{tpu_custom_call.1} parent=1 // pred_fallthru
      _
    // Predicated region
    $region38: #{tpu_custom_call.1} parent=1 // pred_check
      _
    $region39: #{tpu_custom_call.1} parent=1 // pred_check_branch
      %93 = sbr.rel (0) target = $region41
    $region40: #{tpu_custom_call.1} parent=1 // pred_region
      %95 = dma.done [#allocation9], 1024
    $region41: #{tpu_custom_call.1} parent=1 // pred_fallthru
      _
    // Predicated region
    $region42: #{tpu_custom_call.1} parent=1 // pred_check
      _
    $region43: #{tpu_custom_call.1} parent=1 // pred_check_branch
      %97 = sbr.rel (0) target = $region45
    $region44: #{tpu_custom_call.1} parent=1 // pred_region
      %99 = dma.done [#allocation9], 1024
    $region45: #{tpu_custom_call.1} parent=1 // pred_fallthru
      _
    %v100 = vld [vmem:[#allocation2] sm:$0xff]
    %v101 = vld [vmem:[#allocation2 + $0x8] sm:$0xf]
    %104 = vst [vmem:[#allocation1] ss:$4 sm:$0xff] %v100
    %s105 = scalar_lea.vmem [#allocation1], 32
    %106 = vst [vmem:[%s105] ss:$4 sm:$0xff] %v101
    %v107 = vld.sshfl [vmem:[#allocation1] sm:$0xff pattern:$0x73625140]
    %v108 = vld.sshfl [vmem:[#allocation1 + $0x8] sm:$0xff pattern:$0x73625140]
    %v109 = vld.sshfl [vmem:[#allocation1 + $0x10] sm:$0xff pattern:$0x73625140]
    %v110 = vld.sshfl [vmem:[#allocation1 + $0x18] sm:$0xff pattern:$0x73625140]
    %v111 = vld.sshfl [vmem:[#allocation1 + $0x20] sm:$0xff pattern:$0x73625140]
    %v112 = vld.sshfl [vmem:[#allocation1 + $0x28] sm:$0xff pattern:$0x73625140]
    %v119 = vpack.c.bf16 %v107, %v107
    %v120 = vpack.c.bf16 %v108, %v108
    %v121 = vpack.c.bf16 %v109, %v109
    %v122 = vpack.c.bf16 %v110, %v110
    %v123 = vpack.c.bf16 %v111, %v111
    %v124 = vpack.c.bf16 %v112, %v112
    %v125 = vld [vmem:[%s5] sm:$0xf]
    %v126 = vld [vmem:[#allocation5] sm:$0xf]
    %v127 = vld [vmem:[#allocation5 + $0x4] sm:$0xf]
    %v128 = vld [vmem:[#allocation5 + $0x8] sm:$0xf]
    %v129 = vld [vmem:[#allocation5 + $0xc] sm:$0xf]
    %v130 = vld [vmem:[#allocation5 + $0x10] sm:$0xf]
    %v131 = vld [vmem:[#allocation5 + $0x14] sm:$0xf]
    %v132 = vld [vmem:[#allocation5 + $0x18] sm:$0xf]
    %v133 = vld [vmem:[#allocation5 + $0x1c] sm:$0xf]
    %v134 = vld [vmem:[#allocation5 + $0x20] sm:$0xf]
    %v135 = vld [vmem:[#allocation5 + $0x24] sm:$0xf]
    %v136 = vld [vmem:[#allocation5 + $0x28] sm:$0xf]
    %v137 = vld [vmem:[#allocation5 + $0x2c] sm:$0xf]
    %v138 = vld [vmem:[#allocation5 + $0x30] sm:$0xf]
    %v139 = vld [vmem:[#allocation5 + $0x34] sm:$0xf]
    %v140 = vld [vmem:[#allocation5 + $0x38] sm:$0xf]
    %v141 = vld [vmem:[#allocation5 + $0x3c] sm:$0xf]
    %v142 = vld [vmem:[#allocation5 + $0x40] sm:$0xf]
    %v143 = vld [vmem:[#allocation5 + $0x44] sm:$0xf]
    %v144 = vld [vmem:[#allocation5 + $0x48] sm:$0xf]
    %v145 = vld [vmem:[#allocation5 + $0x4c] sm:$0xf]
    %v146 = vld [vmem:[#allocation5 + $0x50] sm:$0xf]
    %v147 = vld [vmem:[#allocation5 + $0x54] sm:$0xf]
    %v148 = vld [vmem:[#allocation5 + $0x58] sm:$0xf]
    %v149 = vld [vmem:[#allocation5 + $0x5c] sm:$0xf]
    %v150 = vld [vmem:[#allocation5 + $0x60] sm:$0xf]
    %v151 = vld [vmem:[#allocation5 + $0x64] sm:$0xf]
    %v152 = vld [vmem:[#allocation5 + $0x68] sm:$0xf]
    %v153 = vld [vmem:[#allocation5 + $0x6c] sm:$0xf]
    %v154 = vld [vmem:[#allocation5 + $0x70] sm:$0xf]
    %v155 = vld [vmem:[#allocation5 + $0x74] sm:$0xf]
    %v156 = vld [vmem:[#allocation5 + $0x78] sm:$0xf]
    %v157 = vld [vmem:[#allocation5 + $0x7c] sm:$0xf]
    %v158 = vld [vmem:[#allocation5 + $0x80] sm:$0xf]
    %v159 = vld [vmem:[#allocation5 + $0x84] sm:$0xf]
    %v160 = vld [vmem:[#allocation5 + $0x88] sm:$0xf]
    %v161 = vld [vmem:[#allocation5 + $0x8c] sm:$0xf]
    %v162 = vld [vmem:[#allocation5 + $0x90] sm:$0xf]
    %v163 = vld [vmem:[#allocation5 + $0x94] sm:$0xf]
    %v164 = vld [vmem:[#allocation5 + $0x98] sm:$0xf]
    %v165 = vld [vmem:[#allocation5 + $0x9c] sm:$0xf]
    %v166 = vld [vmem:[#allocation5 + $0xa0] sm:$0xf]
    %v167 = vld [vmem:[#allocation5 + $0xa4] sm:$0xf]
    %v168 = vld [vmem:[#allocation5 + $0xa8] sm:$0xf]
    %v169 = vld [vmem:[#allocation5 + $0xac] sm:$0xf]
    %v170 = vld [vmem:[#allocation5 + $0xb0] sm:$0xf]
    %v171 = vld [vmem:[#allocation5 + $0xb4] sm:$0xf]
    %v172 = vld [vmem:[#allocation5 + $0xb8] sm:$0xf]
    %v173 = vld [vmem:[#allocation5 + $0xbc] sm:$0xf]
    %v174 = vld [vmem:[#allocation5 + $0xc0] sm:$0xf]
    %v175 = vld [vmem:[#allocation5 + $0xc4] sm:$0xf]
    %v176 = vld [vmem:[#allocation5 + $0xc8] sm:$0xf]
    %v177 = vld [vmem:[#allocation5 + $0xcc] sm:$0xf]
    %v178 = vld [vmem:[#allocation5 + $0xd0] sm:$0xf]
    %v179 = vld [vmem:[#allocation5 + $0xd4] sm:$0xf]
    %v180 = vld [vmem:[#allocation5 + $0xd8] sm:$0xf]
    %v181 = vld [vmem:[#allocation5 + $0xdc] sm:$0xf]
    %v182 = vld [vmem:[#allocation5 + $0xe0] sm:$0xf]
    %v183 = vld [vmem:[#allocation5 + $0xe4] sm:$0xf]
    %v184 = vld [vmem:[#allocation5 + $0xe8] sm:$0xf]
    %v185 = vld [vmem:[#allocation5 + $0xec] sm:$0xf]
    %v186 = vld [vmem:[#allocation5 + $0xf0] sm:$0xf]
    %v187 = vld [vmem:[#allocation5 + $0xf4] sm:$0xf]
    %v188 = vld [vmem:[#allocation5 + $0xf8] sm:$0xf]
    %v189 = vld [vmem:[#allocation5 + $0xfc] sm:$0xf]
    %v190 = vld [vmem:[#allocation5 + $0x100] sm:$0xf]
    %v191 = vld [vmem:[#allocation5 + $0x104] sm:$0xf]
    %v192 = vld [vmem:[#allocation5 + $0x108] sm:$0xf]
    %v193 = vld [vmem:[#allocation5 + $0x10c] sm:$0xf]
    %v194 = vld [vmem:[#allocation5 + $0x110] sm:$0xf]
    %v195 = vld [vmem:[#allocation5 + $0x114] sm:$0xf]
    %v196 = vld [vmem:[#allocation5 + $0x118] sm:$0xf]
    %v197 = vld [vmem:[#allocation5 + $0x11c] sm:$0xf]
    %v198 = vld [vmem:[#allocation5 + $0x120] sm:$0xf]
    %v199 = vld [vmem:[#allocation5 + $0x124] sm:$0xf]
    %v200 = vld [vmem:[#allocation5 + $0x128] sm:$0xf]
    %v201 = vld [vmem:[#allocation5 + $0x12c] sm:$0xf]
    %v202 = vld [vmem:[#allocation5 + $0x130] sm:$0xf]
    %v203 = vld [vmem:[#allocation5 + $0x134] sm:$0xf]
    %v204 = vld [vmem:[#allocation5 + $0x138] sm:$0xf]
    %v205 = vld [vmem:[#allocation5 + $0x13c] sm:$0xf]
    %v206 = vld [vmem:[#allocation5 + $0x140] sm:$0xf]
    %v207 = vld [vmem:[#allocation5 + $0x144] sm:$0xf]
    %v208 = vld [vmem:[#allocation5 + $0x148] sm:$0xf]
    %v209 = vld [vmem:[#allocation5 + $0x14c] sm:$0xf]
    %v210 = vld [vmem:[#allocation5 + $0x150] sm:$0xf]
    %v211 = vld [vmem:[#allocation5 + $0x154] sm:$0xf]
    %v212 = vld [vmem:[#allocation5 + $0x158] sm:$0xf]
    %v213 = vld [vmem:[#allocation5 + $0x15c] sm:$0xf]
    %v214 = vld [vmem:[#allocation5 + $0x160] sm:$0xf]
    %v215 = vld [vmem:[#allocation5 + $0x164] sm:$0xf]
    %v216 = vld [vmem:[#allocation5 + $0x168] sm:$0xf]
    %v217 = vld [vmem:[#allocation5 + $0x16c] sm:$0xf]
    %v218 = vld [vmem:[#allocation5 + $0x170] sm:$0xf]
    %v219 = vld [vmem:[#allocation5 + $0x174] sm:$0xf]
    %v220 = vld [vmem:[#allocation5 + $0x178] sm:$0xf]
    %v221 = vld [vmem:[#allocation5 + $0x17c] sm:$0xf]
    %v222 = vperm.slane %v125, 0
    %v319 = vunpack.c.l.b16 %v126
    %v320 = vunpack.c.l.b16 %v127
    %v321 = vunpack.c.l.b16 %v128
    %v322 = vunpack.c.l.b16 %v129
    %v323 = vunpack.c.l.b16 %v130
    %v324 = vunpack.c.l.b16 %v131
    %v325 = vunpack.c.l.b16 %v132
    %v326 = vunpack.c.l.b16 %v133
    %v327 = vunpack.c.l.b16 %v134
    %v328 = vunpack.c.l.b16 %v135
    %v329 = vunpack.c.l.b16 %v136
    %v330 = vunpack.c.l.b16 %v137
    %v331 = vunpack.c.l.b16 %v138
    %v332 = vunpack.c.l.b16 %v139
    %v333 = vunpack.c.l.b16 %v140
    %v334 = vunpack.c.l.b16 %v141
    %v335 = vunpack.c.l.b16 %v142
    %v336 = vunpack.c.l.b16 %v143
    %v337 = vunpack.c.l.b16 %v144
    %v338 = vunpack.c.l.b16 %v145
    %v339 = vunpack.c.l.b16 %v146
    %v340 = vunpack.c.l.b16 %v147
    %v341 = vunpack.c.l.b16 %v148
    %v342 = vunpack.c.l.b16 %v149
    %v343 = vunpack.c.l.b16 %v150
    %v344 = vunpack.c.l.b16 %v151
    %v345 = vunpack.c.l.b16 %v152
    %v346 = vunpack.c.l.b16 %v153
    %v347 = vunpack.c.l.b16 %v154
    %v348 = vunpack.c.l.b16 %v155
    %v349 = vunpack.c.l.b16 %v156
    %v350 = vunpack.c.l.b16 %v157
    %v351 = vunpack.c.l.b16 %v158
    %v352 = vunpack.c.l.b16 %v159
    %v353 = vunpack.c.l.b16 %v160
    %v354 = vunpack.c.l.b16 %v161
    %v355 = vunpack.c.l.b16 %v162
    %v356 = vunpack.c.l.b16 %v163
    %v357 = vunpack.c.l.b16 %v164
    %v358 = vunpack.c.l.b16 %v165
    %v359 = vunpack.c.l.b16 %v166
    %v360 = vunpack.c.l.b16 %v167
    %v361 = vunpack.c.l.b16 %v168
    %v362 = vunpack.c.l.b16 %v169
    %v363 = vunpack.c.l.b16 %v170
    %v364 = vunpack.c.l.b16 %v171
    %v365 = vunpack.c.l.b16 %v172
    %v366 = vunpack.c.l.b16 %v173
    %v367 = vunpack.c.l.b16 %v174
    %v368 = vunpack.c.l.b16 %v175
    %v369 = vunpack.c.l.b16 %v176
    %v370 = vunpack.c.l.b16 %v177
    %v371 = vunpack.c.l.b16 %v178
    %v372 = vunpack.c.l.b16 %v179
    %v373 = vunpack.c.l.b16 %v180
    %v374 = vunpack.c.l.b16 %v181
    %v375 = vunpack.c.l.b16 %v182
    %v376 = vunpack.c.l.b16 %v183
    %v377 = vunpack.c.l.b16 %v184
    %v378 = vunpack.c.l.b16 %v185
    %v379 = vunpack.c.l.b16 %v186
    %v380 = vunpack.c.l.b16 %v187
    %v381 = vunpack.c.l.b16 %v188
    %v382 = vunpack.c.l.b16 %v189
    %v383 = vunpack.c.l.b16 %v190
    %v384 = vunpack.c.l.b16 %v191
    %v385 = vunpack.c.l.b16 %v192
    %v386 = vunpack.c.l.b16 %v193
    %v387 = vunpack.c.l.b16 %v194
    %v388 = vunpack.c.l.b16 %v195
    %v389 = vunpack.c.l.b16 %v196
    %v390 = vunpack.c.l.b16 %v197
    %v391 = vunpack.c.l.b16 %v198
    %v392 = vunpack.c.l.b16 %v199
    %v393 = vunpack.c.l.b16 %v200
    %v394 = vunpack.c.l.b16 %v201
    %v395 = vunpack.c.l.b16 %v202
    %v396 = vunpack.c.l.b16 %v203
    %v397 = vunpack.c.l.b16 %v204
    %v398 = vunpack.c.l.b16 %v205
    %v399 = vunpack.c.l.b16 %v206
    %v400 = vunpack.c.l.b16 %v207
    %v401 = vunpack.c.l.b16 %v208
    %v402 = vunpack.c.l.b16 %v209
    %v403 = vunpack.c.l.b16 %v210
    %v404 = vunpack.c.l.b16 %v211
    %v405 = vunpack.c.l.b16 %v212
    %v406 = vunpack.c.l.b16 %v213
    %v407 = vunpack.c.l.b16 %v214
    %v408 = vunpack.c.l.b16 %v215
    %v409 = vunpack.c.l.b16 %v216
    %v410 = vunpack.c.l.b16 %v217
    %v411 = vunpack.c.l.b16 %v218
    %v412 = vunpack.c.l.b16 %v219
    %v413 = vunpack.c.l.b16 %v220
    %v414 = vunpack.c.l.b16 %v221
    %v415 = vpack.c.b16 %v320, %v319
    %v416 = vpack.c.b16 %v322, %v321
    %v417 = vpack.c.b16 %v324, %v323
    %v418 = vpack.c.b16 %v326, %v325
    %v419 = vpack.c.b16 %v328, %v327
    %v420 = vpack.c.b16 %v330, %v329
    %v421 = vpack.c.b16 %v332, %v331
    %v422 = vpack.c.b16 %v334, %v333
    %v423 = vpack.c.b16 %v336, %v335
    %v424 = vpack.c.b16 %v338, %v337
    %v425 = vpack.c.b16 %v340, %v339
    %v426 = vpack.c.b16 %v342, %v341
    %v427 = vpack.c.b16 %v344, %v343
    %v428 = vpack.c.b16 %v346, %v345
    %v429 = vpack.c.b16 %v348, %v347
    %v430 = vpack.c.b16 %v350, %v349
    %v431 = vpack.c.b16 %v352, %v351
    %v432 = vpack.c.b16 %v354, %v353
    %v433 = vpack.c.b16 %v356, %v355
    %v434 = vpack.c.b16 %v358, %v357
    %v435 = vpack.c.b16 %v360, %v359
    %v436 = vpack.c.b16 %v362, %v361
    %v437 = vpack.c.b16 %v364, %v363
    %v438 = vpack.c.b16 %v366, %v365
    %v439 = vpack.c.b16 %v368, %v367
    %v440 = vpack.c.b16 %v370, %v369
    %v441 = vpack.c.b16 %v372, %v371
    %v442 = vpack.c.b16 %v374, %v373
    %v443 = vpack.c.b16 %v376, %v375
    %v444 = vpack.c.b16 %v378, %v377
    %v445 = vpack.c.b16 %v380, %v379
    %v446 = vpack.c.b16 %v382, %v381
    %v447 = vpack.c.b16 %v384, %v383
    %v448 = vpack.c.b16 %v386, %v385
    %v449 = vpack.c.b16 %v388, %v387
    %v450 = vpack.c.b16 %v390, %v389
    %v451 = vpack.c.b16 %v392, %v391
    %v452 = vpack.c.b16 %v394, %v393
    %v453 = vpack.c.b16 %v396, %v395
    %v454 = vpack.c.b16 %v398, %v397
    %v455 = vpack.c.b16 %v400, %v399
    %v456 = vpack.c.b16 %v402, %v401
    %v457 = vpack.c.b16 %v404, %v403
    %v458 = vpack.c.b16 %v406, %v405
    %v459 = vpack.c.b16 %v408, %v407
    %v460 = vpack.c.b16 %v410, %v409
    %v461 = vpack.c.b16 %v412, %v411
    %v462 = vpack.c.b16 %v414, %v413
    %511 = vmatpush.bf16.msra.mxu0 %v422
    %512 = vmatpush.bf16.msra.mxu0 %v421
    %513 = vmatpush.bf16.msra.mxu0 %v420
    %514 = vmatpush.bf16.msra.mxu0 %v419
    %515 = vmatpush.bf16.msra.mxu0 %v418
    %516 = vmatpush.bf16.msra.mxu0 %v417
    %517 = vmatpush.bf16.msra.mxu0 %v416
    %518 = vmatpush.bf16.msra.mxu0 %v415
    %519 = vmatmul.bf16.gmra.mxu0 %v119
    %v520 = vpop.f32.mrf.mxu0
    %v521 = vadd.f32 %v222, %v520
    %v522 = vpop.f32.mrf.mxu0
    %523 = vdwg.mxu0
    %524 = vmatpush.bf16.msra.mxu0 %v430
    %525 = vmatpush.bf16.msra.mxu0 %v429
    %526 = vmatpush.bf16.msra.mxu0 %v428
    %527 = vmatpush.bf16.msra.mxu0 %v427
    %528 = vmatpush.bf16.msra.mxu0 %v426
    %529 = vmatpush.bf16.msra.mxu0 %v425
    %530 = vmatpush.bf16.msra.mxu0 %v424
    %531 = vmatpush.bf16.msra.mxu0 %v423
    %532 = vmatmul.bf16.gmra.mxu0 %v120
    %v533 = vpop.f32.mrf.mxu0
    %v534 = vadd.f32 %v521, %v533
    %v535 = vpop.f32.mrf.mxu0
    %536 = vdwg.mxu0
    %537 = vmatpush.bf16.msra.mxu0 %v438
    %538 = vmatpush.bf16.msra.mxu0 %v437
    %539 = vmatpush.bf16.msra.mxu0 %v436
    %540 = vmatpush.bf16.msra.mxu0 %v435
    %541 = vmatpush.bf16.msra.mxu0 %v434
    %542 = vmatpush.bf16.msra.mxu0 %v433
    %543 = vmatpush.bf16.msra.mxu0 %v432
    %544 = vmatpush.bf16.msra.mxu0 %v431
    %545 = vmatmul.bf16.gmra.mxu0 %v121
    %v546 = vpop.f32.mrf.mxu0
    %v547 = vadd.f32 %v534, %v546
    %v548 = vpop.f32.mrf.mxu0
    %549 = vdwg.mxu0
    %550 = vmatpush.bf16.msra.mxu0 %v446
    %551 = vmatpush.bf16.msra.mxu0 %v445
    %552 = vmatpush.bf16.msra.mxu0 %v444
    %553 = vmatpush.bf16.msra.mxu0 %v443
    %554 = vmatpush.bf16.msra.mxu0 %v442
    %555 = vmatpush.bf16.msra.mxu0 %v441
    %556 = vmatpush.bf16.msra.mxu0 %v440
    %557 = vmatpush.bf16.msra.mxu0 %v439
    %558 = vmatmul.bf16.gmra.mxu0 %v122
    %v559 = vpop.f32.mrf.mxu0
    %v560 = vadd.f32 %v547, %v559
    %v561 = vpop.f32.mrf.mxu0
    %562 = vdwg.mxu0
    %563 = vmatpush.bf16.msra.mxu0 %v454
    %564 = vmatpush.bf16.msra.mxu0 %v453
    %565 = vmatpush.bf16.msra.mxu0 %v452
    %566 = vmatpush.bf16.msra.mxu0 %v451
    %567 = vmatpush.bf16.msra.mxu0 %v450
    %568 = vmatpush.bf16.msra.mxu0 %v449
    %569 = vmatpush.bf16.msra.mxu0 %v448
    %570 = vmatpush.bf16.msra.mxu0 %v447
    %571 = vmatmul.bf16.gmra.mxu0 %v123
    %v572 = vpop.f32.mrf.mxu0
    %v573 = vadd.f32 %v560, %v572
    %v574 = vpop.f32.mrf.mxu0
    %575 = vdwg.mxu0
    %576 = vmatpush.bf16.msra.mxu0 %v462
    %577 = vmatpush.bf16.msra.mxu0 %v461
    %578 = vmatpush.bf16.msra.mxu0 %v460
    %579 = vmatpush.bf16.msra.mxu0 %v459
    %580 = vmatpush.bf16.msra.mxu0 %v458
    %581 = vmatpush.bf16.msra.mxu0 %v457
    %582 = vmatpush.bf16.msra.mxu0 %v456
    %583 = vmatpush.bf16.msra.mxu0 %v455
    %584 = vmatmul.bf16.gmra.mxu0 %v124
    %v585 = vpop.f32.mrf.mxu0
    %v586 = vadd.f32 %v573, %v585
    %v587 = vpop.f32.mrf.mxu0
    %588 = vdwg.mxu0
    %v589 = vmax.f32 %v586, 0.0
    %v590 = vpack.c.bf16 %v589, %v589
    %v591 = vld [vmem:[#allocation7] sm:$0xf]
    %v592 = vld [vmem:[#allocation7 + $0x4] sm:$0xf]
    %v593 = vld [vmem:[#allocation7 + $0x8] sm:$0xf]
    %v594 = vld [vmem:[#allocation7 + $0xc] sm:$0xf]
    %v595 = vld [vmem:[#allocation7 + $0x10] sm:$0xf]
    %v596 = vld [vmem:[#allocation7 + $0x14] sm:$0xf]
    %v597 = vld [vmem:[#allocation7 + $0x18] sm:$0xf]
    %v598 = vld [vmem:[#allocation7 + $0x1c] sm:$0xf]
    %v599 = vld [vmem:[#allocation7 + $0x20] sm:$0xf]
    %v600 = vld [vmem:[#allocation7 + $0x24] sm:$0xf]
    %v601 = vld [vmem:[#allocation7 + $0x28] sm:$0xf]
    %v602 = vld [vmem:[#allocation7 + $0x2c] sm:$0xf]
    %v603 = vld [vmem:[#allocation7 + $0x30] sm:$0xf]
    %v604 = vld [vmem:[#allocation7 + $0x34] sm:$0xf]
    %v605 = vld [vmem:[#allocation7 + $0x38] sm:$0xf]
    %v606 = vld [vmem:[#allocation7 + $0x3c] sm:$0xf]
    %v607 = vperm.slane %v125, 1
    %v624 = vunpack.c.l.b16 %v591
    %v625 = vunpack.c.l.b16 %v592
    %v626 = vunpack.c.l.b16 %v593
    %v627 = vunpack.c.l.b16 %v594
    %v628 = vunpack.c.l.b16 %v595
    %v629 = vunpack.c.l.b16 %v596
    %v630 = vunpack.c.l.b16 %v597
    %v631 = vunpack.c.l.b16 %v598
    %v632 = vunpack.c.l.b16 %v599
    %v633 = vunpack.c.l.b16 %v600
    %v634 = vunpack.c.l.b16 %v601
    %v635 = vunpack.c.l.b16 %v602
    %v636 = vunpack.c.l.b16 %v603
    %v637 = vunpack.c.l.b16 %v604
    %v638 = vunpack.c.l.b16 %v605
    %v639 = vunpack.c.l.b16 %v606
    %v640 = vpack.c.b16 %v625, %v624
    %v641 = vpack.c.b16 %v627, %v626
    %v642 = vpack.c.b16 %v629, %v628
    %v643 = vpack.c.b16 %v631, %v630
    %v644 = vpack.c.b16 %v633, %v632
    %v645 = vpack.c.b16 %v635, %v634
    %v646 = vpack.c.b16 %v637, %v636
    %v647 = vpack.c.b16 %v639, %v638
    %656 = vmatpush.bf16.msra.mxu0 %v647
    %657 = vmatpush.bf16.msra.mxu0 %v646
    %658 = vmatpush.bf16.msra.mxu0 %v645
    %659 = vmatpush.bf16.msra.mxu0 %v644
    %660 = vmatpush.bf16.msra.mxu0 %v643
    %661 = vmatpush.bf16.msra.mxu0 %v642
    %662 = vmatpush.bf16.msra.mxu0 %v641
    %663 = vmatpush.bf16.msra.mxu0 %v640
    %664 = vmatmul.bf16.gmra.mxu0 %v590
    %v665 = vpop.f32.mrf.mxu0
    %v666 = vadd.f32 %v607, %v665
    %v667 = vpop.f32.mrf.mxu0
    %668 = vdwg.mxu0
    %v669 = vmax.f32 %v666, 0.0
    %v670 = vpack.c.bf16 %v669, %v669
    %v671 = vld [vmem:[#allocation8] sm:$0xf]
    %v672 = vld [vmem:[#allocation8 + $0x4] sm:$0xf]
    %v673 = vld [vmem:[#allocation8 + $0x8] sm:$0xf]
    %v674 = vld [vmem:[#allocation8 + $0xc] sm:$0xf]
    %v675 = vld [vmem:[#allocation8 + $0x10] sm:$0xf]
    %v676 = vld [vmem:[#allocation8 + $0x14] sm:$0xf]
    %v677 = vld [vmem:[#allocation8 + $0x18] sm:$0xf]
    %v678 = vld [vmem:[#allocation8 + $0x1c] sm:$0xf]
    %v679 = vld [vmem:[#allocation8 + $0x20] sm:$0xf]
    %v680 = vld [vmem:[#allocation8 + $0x24] sm:$0xf]
    %v681 = vld [vmem:[#allocation8 + $0x28] sm:$0xf]
    %v682 = vld [vmem:[#allocation8 + $0x2c] sm:$0xf]
    %v683 = vld [vmem:[#allocation8 + $0x30] sm:$0xf]
    %v684 = vld [vmem:[#allocation8 + $0x34] sm:$0xf]
    %v685 = vld [vmem:[#allocation8 + $0x38] sm:$0xf]
    %v686 = vld [vmem:[#allocation8 + $0x3c] sm:$0xf]
    %v687 = vperm.slane %v125, 2
    %v704 = vunpack.c.l.b16 %v671
    %v705 = vunpack.c.l.b16 %v672
    %v706 = vunpack.c.l.b16 %v673
    %v707 = vunpack.c.l.b16 %v674
    %v708 = vunpack.c.l.b16 %v675
    %v709 = vunpack.c.l.b16 %v676
    %v710 = vunpack.c.l.b16 %v677
    %v711 = vunpack.c.l.b16 %v678
    %v712 = vunpack.c.l.b16 %v679
    %v713 = vunpack.c.l.b16 %v680
    %v714 = vunpack.c.l.b16 %v681
    %v715 = vunpack.c.l.b16 %v682
    %v716 = vunpack.c.l.b16 %v683
    %v717 = vunpack.c.l.b16 %v684
    %v718 = vunpack.c.l.b16 %v685
    %v719 = vunpack.c.l.b16 %v686
    %v720 = vpack.c.b16 %v705, %v704
    %v721 = vpack.c.b16 %v707, %v706
    %v722 = vpack.c.b16 %v709, %v708
    %v723 = vpack.c.b16 %v711, %v710
    %v724 = vpack.c.b16 %v713, %v712
    %v725 = vpack.c.b16 %v715, %v714
    %v726 = vpack.c.b16 %v717, %v716
    %v727 = vpack.c.b16 %v719, %v718
    %736 = vmatpush.bf16.msra.mxu0 %v727
    %737 = vmatpush.bf16.msra.mxu0 %v726
    %738 = vmatpush.bf16.msra.mxu0 %v725
    %739 = vmatpush.bf16.msra.mxu0 %v724
    %740 = vmatpush.bf16.msra.mxu0 %v723
    %741 = vmatpush.bf16.msra.mxu0 %v722
    %742 = vmatpush.bf16.msra.mxu0 %v721
    %743 = vmatpush.bf16.msra.mxu0 %v720
    %744 = vmatmul.bf16.gmra.mxu0 %v670
    %v745 = vpop.f32.mrf.mxu0
    %v746 = vadd.f32 %v687, %v745
    %v747 = vpop.f32.mrf.mxu0
    %748 = vdwg.mxu0
    %v749 = vmax.f32 %v746, 0.0
    %v750 = vpack.c.bf16 %v749, %v749
    %v751 = vld [vmem:[#allocation10] sm:$0xf]
    %v752 = vld [vmem:[#allocation10 + $0x4] sm:$0xf]
    %v753 = vld [vmem:[#allocation10 + $0x8] sm:$0xf]
    %v754 = vld [vmem:[#allocation10 + $0xc] sm:$0xf]
    %v755 = vld [vmem:[#allocation10 + $0x10] sm:$0xf]
    %v756 = vld [vmem:[#allocation10 + $0x14] sm:$0xf]
    %v757 = vld [vmem:[#allocation10 + $0x18] sm:$0xf]
    %v758 = vld [vmem:[#allocation10 + $0x1c] sm:$0xf]
    %v759 = vld [vmem:[#allocation10 + $0x20] sm:$0xf]
    %v760 = vld [vmem:[#allocation10 + $0x24] sm:$0xf]
    %v761 = vld [vmem:[#allocation10 + $0x28] sm:$0xf]
    %v762 = vld [vmem:[#allocation10 + $0x2c] sm:$0xf]
    %v763 = vld [vmem:[#allocation10 + $0x30] sm:$0xf]
    %v764 = vld [vmem:[#allocation10 + $0x34] sm:$0xf]
    %v765 = vld [vmem:[#allocation10 + $0x38] sm:$0xf]
    %v766 = vld [vmem:[#allocation10 + $0x3c] sm:$0xf]
    %v767 = vperm.slane %v125, 3
    %v784 = vunpack.c.l.b16 %v751
    %v785 = vunpack.c.l.b16 %v752
    %v786 = vunpack.c.l.b16 %v753
    %v787 = vunpack.c.l.b16 %v754
    %v788 = vunpack.c.l.b16 %v755
    %v789 = vunpack.c.l.b16 %v756
    %v790 = vunpack.c.l.b16 %v757
    %v791 = vunpack.c.l.b16 %v758
    %v792 = vunpack.c.l.b16 %v759
    %v793 = vunpack.c.l.b16 %v760
    %v794 = vunpack.c.l.b16 %v761
    %v795 = vunpack.c.l.b16 %v762
    %v796 = vunpack.c.l.b16 %v763
    %v797 = vunpack.c.l.b16 %v764
    %v798 = vunpack.c.l.b16 %v765
    %v799 = vunpack.c.l.b16 %v766
    %v800 = vpack.c.b16 %v785, %v784
    %v801 = vpack.c.b16 %v787, %v786
    %v802 = vpack.c.b16 %v789, %v788
    %v803 = vpack.c.b16 %v791, %v790
    %v804 = vpack.c.b16 %v793, %v792
    %v805 = vpack.c.b16 %v795, %v794
    %v806 = vpack.c.b16 %v797, %v796
    %v807 = vpack.c.b16 %v799, %v798
    %816 = vmatpush.bf16.msra.mxu0 %v807
    %817 = vmatpush.bf16.msra.mxu0 %v806
    %818 = vmatpush.bf16.msra.mxu0 %v805
    %819 = vmatpush.bf16.msra.mxu0 %v804
    %820 = vmatpush.bf16.msra.mxu0 %v803
    %821 = vmatpush.bf16.msra.mxu0 %v802
    %822 = vmatpush.bf16.msra.mxu0 %v801
    %823 = vmatpush.bf16.msra.mxu0 %v800
    %824 = vmatmul.bf16.gmra.mxu0 %v750
    %v825 = vpop.f32.mrf.mxu0
    %v826 = vadd.f32 %v767, %v825
    %v827 = vpop.f32.mrf.mxu0
    %828 = vdwg.mxu0
    %829 = vst [vmem:[#allocation11] sm:$0x3] %v826
    // Predicated region
    $region46: #{tpu_custom_call.1} parent=1 // pred_check
      _
    $region47: #{tpu_custom_call.1} parent=1 // pred_check_branch
      %831 = sbr.rel (0) target = $region49
    $region48: #{tpu_custom_call.1} parent=1 // pred_region
      %833 = vsyncadd [#allocation4], 0
      %s835 = sshll.u32 [#allocation11], 4
      %s836 = int_to_ptr.vmem [resolvable:$true] %s835
      %s837 = sshll.u32 %s6, 4
      %s838 = int_to_ptr.hbm [resolvable:$true] %s837
      %840 = dma.vmem_to_hbm [thread:$0]  %s836, 32, %s838, [#allocation4]
    $region49: #{tpu_custom_call.1} parent=1 // pred_fallthru
      _
    // Predicated region
    $region50: #{tpu_custom_call.1} parent=1 // pred_check
      _
    $region51: #{tpu_custom_call.1} parent=1 // pred_check_branch
      %842 = sbr.rel (0) target = $region53
    $region52: #{tpu_custom_call.1} parent=1 // pred_region
      %844 = dma.done [#allocation4], 32
    $region53: #{tpu_custom_call.1} parent=1 // pred_fallthru
      _
    %845 = vsyncpa [#allocation3], 1
    %846 = vsyncpa [#allocation6], 1
    %847 = vsyncpa [#allocation9], 1
    %848 = vsyncpa [#allocation4], 1

</llo_original>
